<compile_context>
chip_gen: v7x
topology: tpu7x:2x2x1
jax: 0.10.0
libtpu: 0.0.40
codegen_flags: <defaults>
</compile_context>

<pallas_src>
import jax
import jax.numpy as jnp
import numpy as np
from jax.experimental import pallas as pl
from jax.experimental.pallas import tpu as pltpu

EPS = 1e-5


# ---------------------------------------------------------------------------
# Tile planning: VMEM-aware, overhead-aware
# ---------------------------------------------------------------------------
def _vmem_limit_bytes():
    try:
        cap = int(pltpu.get_tpu_info().vmem_capacity_bytes)
    except Exception:
        cap = 64 << 20  # conservative fallback (v7x-sized)
    # Use at most half the physical VMEM as the scoped limit, capped at 64 MiB.
    return min(cap // 2, 64 << 20)


def _largest_tile(l_total, tl_cap):
    """Largest multiple-of-128 divisor of l_total that is <= tl_cap (l_total % 128 == 0)."""
    k = max(1, min(tl_cap, l_total) // 128)
    while k > 1 and (l_total % (k * 128)) != 0:
        k -= 1
    return k * 128


def _plan_tiles(L, c_in, c_out):
    """Returns (TL, L_pad, PW, vmem_limit)."""
    vmem_limit = _vmem_limit_bytes()
    # Per-column VMEM cost across both kernels (f32, double-buffered streams):
    #   kernel A: 2*c_in (x in) + 2*c_out (y out);  kernel B: 4*c_out (y in + out).
    per_col = 4 * (2 * c_in + 4 * c_out)
    # Leave room for the resident W block, stat partials and Mosaic scratch.
    target = max(1 << 20, vmem_limit // 3)
    tl_cap = max(128, (target // per_col) // 128 * 128)

    if L % 128 == 0:
        return _largest_tile(L, tl_cap), L, 128, vmem_limit
    # Misaligned L: if the whole (unpadded) L fits the budget use it as one lane block
    # (correct, just masked stores); otherwise zero-pad L to a multiple of 128 and tile.
    if per_col * L <= target:
        return L, L, 1, vmem_limit
    L_pad = ((L + 127) // 128) * 128
    return _largest_tile(L_pad, tl_cap), L_pad, 128, vmem_limit


# ---------------------------------------------------------------------------
# Kernel A: fused channel-mixing matmul + bias + BN statistics (sum, sum-of-squares)
#           Stats are taken on z = W @ x (pre-bias) into lane-dense (C_out, PW) partials.
# ---------------------------------------------------------------------------
def _make_linear_stats_kernel(tl, pw):
    n_slabs = tl // pw if pw > 1 else 1

    def kernel(x_ref, w_ref, b_ref, y_ref, sum_ref, ssq_ref):
        # x_ref: (C_in, TL)   w_ref: (C_out, C_in)   b_ref: (C_out, 1)
        # y_ref: (C_out, TL)  sum_ref/ssq_ref: (C_out, PW) per-batch resident accumulators
        @pl.when(pl.program_id(1) == 0)
        def _():
            sum_ref[...] = jnp.zeros_like(sum_ref)
            ssq_ref[...] = jnp.zeros_like(ssq_ref)

        z = jnp.dot(w_ref[...], x_ref[...], preferred_element_type=jnp.float32)
        y_ref[...] = (z + b_ref[...]).astype(y_ref.dtype)

        if pw == 1:
            sum_ref[...] += jnp.sum(z, axis=1, keepdims=True)
            ssq_ref[...] += jnp.sum(z * z, axis=1, keepdims=True)
        else:
            # Lane-dense 128-wide partials: static slab adds (pure VALU, no XLU reduce,
            # no masked narrow stores).
            blk = z[:, 0:pw]
            s = blk
            q = blk * blk
            for i in range(1, n_slabs):
                blk = z[:, i * pw:(i + 1) * pw]
                s = s + blk
                q = q + blk * blk
            sum_ref[...] += s
            ssq_ref[...] += q

    return kernel


# ---------------------------------------------------------------------------
# Kernel B: tiled elementwise scale/shift (precomputed BN affine) + ReLU, in place on y
# ---------------------------------------------------------------------------
def _bn_relu_kernel(y_ref, scale_ref, shift_ref, o_ref):
    # y_ref/o_ref: (C_out, TL); scale/shift: (C_out, 1)
    o_ref[...] = jnp.maximum(
        y_ref[...] * scale_ref[...] + shift_ref[...], 0.0
    ).astype(o_ref.dtype)


# ---------------------------------------------------------------------------
# Wrapper
# ---------------------------------------------------------------------------
def ncl_linear(x, w, b, gamma, beta):
    """x: (N, C_in, L); w: (C_out, C_in); b/gamma/beta: (C_out,). Returns (N, C_out, L) f32."""
    N, C_in, L = x.shape
    C_out = w.shape[0]
    M = N * L  # true element count per channel for BN stats

    TL, L_pad, PW, vmem_limit = _plan_tiles(L, C_in, C_out)
    n_l = L_pad // TL

    x32 = x.astype(jnp.float32)
    if L_pad != L:
        # Zero padding: padded columns give z = W@0 = 0, contributing nothing to the
        # (pre-bias) stat sums, so no masking is needed.
        x32 = jnp.pad(x32, ((0, 0), (0, 0), (0, L_pad - L)))
    w32 = w.astype(jnp.float32)
    b32 = b.astype(jnp.float32)
    b2 = b32.reshape(C_out, 1)

    # Kernel A: grid (batch, L-tile). Batch axis is 'parallel' (per-batch stat partials),
    # L-tile axis is 'arbitrary' (resident accumulators across it).
    y, s_part, q_part = pl.pallas_call(
        _make_linear_stats_kernel(TL, PW),
        out_shape=(
            jax.ShapeDtypeStruct((N, C_out, L_pad), jnp.float32),
            jax.ShapeDtypeStruct((N, C_out, PW), jnp.float32),
            jax.ShapeDtypeStruct((N, C_out, PW), jnp.float32),
        ),
        grid_spec=pltpu.PrefetchScalarGridSpec(
            num_scalar_prefetch=0,
            grid=(N, n_l),
            in_specs=[
                pl.BlockSpec((pl.Squeezed(), C_in, TL), lambda n, l: (n, 0, l)),
                pl.BlockSpec((C_out, C_in), lambda n, l: (0, 0)),
                pl.BlockSpec((C_out, 1), lambda n, l: (0, 0)),
            ],
            out_specs=[
                pl.BlockSpec((pl.Squeezed(), C_out, TL), lambda n, l: (n, 0, l)),
                pl.BlockSpec((pl.Squeezed(), C_out, PW), lambda n, l: (n, 0, 0)),
                pl.BlockSpec((pl.Squeezed(), C_out, PW), lambda n, l: (n, 0, 0)),
            ],
        ),
        compiler_params=pltpu.CompilerParams(
            dimension_semantics=("parallel", "arbitrary"),
            vmem_limit_bytes=vmem_limit,
        ),
    )(x32, w32, b2)

    # Tiny XLA epilogue: fold stats into per-channel scale/shift once.
    s_tot = jnp.sum(s_part, axis=(0, 2))                # (C_out,)
    q_tot = jnp.sum(q_part, axis=(0, 2))                # (C_out,)
    mean_z = s_tot / M
    var = jnp.maximum(q_tot / M - mean_z * mean_z, 0.0)  # biased var; shift-invariant
    mean = mean_z + b32                                  # add bias to mean after the fact
    scale = gamma.astype(jnp.float32) * jax.lax.rsqrt(var + EPS)
    shift = beta.astype(jnp.float32) - mean * scale
    scale2 = scale.reshape(C_out, 1)
    shift2 = shift.reshape(C_out, 1)

    # Kernel B: fused scale/shift + ReLU, fully parallel, written in place onto y.
    out = pl.pallas_call(
        _bn_relu_kernel,
        out_shape=jax.ShapeDtypeStruct((N, C_out, L_pad), jnp.float32),
        grid_spec=pltpu.PrefetchScalarGridSpec(
            num_scalar_prefetch=0,
            grid=(N, n_l),
            in_specs=[
                pl.BlockSpec((pl.Squeezed(), C_out, TL), lambda n, l: (n, 0, l)),
                pl.BlockSpec((C_out, 1), lambda n, l: (0, 0)),
                pl.BlockSpec((C_out, 1), lambda n, l: (0, 0)),
            ],
            out_specs=pl.BlockSpec((pl.Squeezed(), C_out, TL), lambda n, l: (n, 0, l)),
        ),
        compiler_params=pltpu.CompilerParams(
            dimension_semantics=("parallel", "parallel"),
            vmem_limit_bytes=vmem_limit,
        ),
        input_output_aliases={0: 0},
    )(y, scale2, shift2)

    if L_pad != L:
        out = out[:, :, :L]
    return out
    # TODO(synk): nn.BatchNorm1d running_mean/running_var buffer updates (training-mode
    # side effect) are not materialized; only the forward output is produced.


# ---------------------------------------------------------------------------
# Pure-JAX reference (mirrors the PyTorch forward in training mode)
# ---------------------------------------------------------------------------
def ncl_linear_ref(x, w, b, gamma, beta):
    xt = jnp.transpose(x, (0, 2, 1))                 # (N, L, C_in)
    y = jnp.einsum("nlc,oc->nlo", xt, w) + b         # (N, L, C_out)
    y = jnp.transpose(y, (0, 2, 1))                  # (N, C_out, L)
    mean = jnp.mean(y, axis=(0, 2), keepdims=True)
    var = jnp.mean((y - mean) ** 2, axis=(0, 2), keepdims=True)
    yhat = (y - mean) / jnp.sqrt(var + EPS)
    out = yhat * gamma.reshape(1, -1, 1) + beta.reshape(1, -1, 1)
    return jnp.maximum(out, 0.0)


def _run_case(key, N, C_in, L, C_out):
    kx, kw, kb = jax.random.split(key, 3)
    x = jax.random.normal(kx, (N, C_in, L), dtype=jnp.float32)
    bound = 1.0 / np.sqrt(C_in)
    w = jax.random.uniform(kw, (C_out, C_in), minval=-bound, maxval=bound,
                           dtype=jnp.float32)
    b = jax.random.uniform(kb, (C_out,), minval=-bound, maxval=bound,
                           dtype=jnp.float32)
    gamma = jnp.ones((C_out,), dtype=jnp.float32)   # BatchNorm1d default weight
    beta = jnp.zeros((C_out,), dtype=jnp.float32)   # BatchNorm1d default bias

    out = jax.block_until_ready(ncl_linear(x, w, b, gamma, beta))
    ref = jax.block_until_ready(ncl_linear_ref(x, w, b, gamma, beta))
    np.testing.assert_allclose(np.asarray(out), np.asarray(ref), rtol=1e-4, atol=1e-5)


if __name__ == "__main__":
    key = jax.random.PRNGKey(0)
    k1, k2 = jax.random.split(key)
    # Small shape consistent with the module (exercises the misaligned-L full-block path).
    _run_case(k1, N=2, C_in=4, L=16, C_out=8)
    # 128-aligned L (exercises the lane-dense tiled + wide-partial stats path).
    _run_case(k2, N=2, C_in=8, L=256, C_out=16)
    print("KERNEL_OK")
</pallas_src>

<mosaic_0001>
module attributes {stable_mosaic.version = 11 : i64} {
  func.func @kernel(%arg0: i32, %arg1: i32, %arg2: memref<1x4x16xf32, #tpu.memory_space<vmem>>, %arg3: memref<8x4xf32, #tpu.memory_space<vmem>>, %arg4: memref<8x1xf32, #tpu.memory_space<vmem>>, %arg5: memref<1x8x16xf32, #tpu.memory_space<vmem>>, %arg6: memref<1x8x1xf32, #tpu.memory_space<vmem>>, %arg7: memref<1x8x1xf32, #tpu.memory_space<vmem>>) attributes {dimension_semantics = [#tpu.dimension_semantics<parallel>, #tpu.dimension_semantics<arbitrary>], iteration_bounds = array<i64: 2, 1>, scalar_prefetch = 0 : i64, scratch_operands = 0 : i64, tpu.core_type = #tpu.core_type<tc>, window_params = [{transform_indices = @transform_0, window_bounds = array<i64: 1, 4, 16>}, {pipeline_mode = #tpu.pipeline_mode<synchronous>, transform_indices = @transform_1, window_bounds = array<i64: 8, 4>}, {pipeline_mode = #tpu.pipeline_mode<synchronous>, transform_indices = @transform_2, window_bounds = array<i64: 8, 1>}, {transform_indices = @transform_3, window_bounds = array<i64: 1, 8, 16>}, {transform_indices = @transform_4, window_bounds = array<i64: 1, 8, 1>}, {transform_indices = @transform_5, window_bounds = array<i64: 1, 8, 1>}]} {
    %c0_i32 = arith.constant 0 : i32
    %0 = arith.cmpi eq, %arg1, %c0_i32 : i32
    %1 = arith.extui %0 : i1 to i32
    %c0_i32_0 = arith.constant 0 : i32
    %2 = arith.cmpi ne, %1, %c0_i32_0 : i32
    scf.if %2 {
      %cst_24 = arith.constant 0.000000e+00 : f32
      %30 = vector.broadcast %cst_24 : f32 to vector<8x1xf32>
      %c0_25 = arith.constant 0 : index
      %c0_26 = arith.constant 0 : index
      %c0_27 = arith.constant 0 : index
      %31 = vector.load %arg6[%c0_25, %c0_26, %c0_27] : memref<1x8x1xf32, #tpu.memory_space<vmem>>, vector<1x8x1xf32>
      %32 = vector.shape_cast %31 : vector<1x8x1xf32> to vector<8x1xf32>
      %33 = vector.shape_cast %30 : vector<8x1xf32> to vector<1x8x1xf32>
      tpu.vector_store %arg6[%c0_25, %c0_26, %c0_27], %33 {strides = array<i32>} : memref<1x8x1xf32, #tpu.memory_space<vmem>>, vector<1x8x1xf32>,
      %cst_28 = arith.constant 0.000000e+00 : f32
      %34 = vector.broadcast %cst_28 : f32 to vector<8x1xf32>
      %c0_29 = arith.constant 0 : index
      %c0_30 = arith.constant 0 : index
      %c0_31 = arith.constant 0 : index
      %35 = vector.load %arg7[%c0_29, %c0_30, %c0_31] : memref<1x8x1xf32, #tpu.memory_space<vmem>>, vector<1x8x1xf32>
      %36 = vector.shape_cast %35 : vector<1x8x1xf32> to vector<8x1xf32>
      %37 = vector.shape_cast %34 : vector<8x1xf32> to vector<1x8x1xf32>
      tpu.vector_store %arg7[%c0_29, %c0_30, %c0_31], %37 {strides = array<i32>} : memref<1x8x1xf32, #tpu.memory_space<vmem>>, vector<1x8x1xf32>,
    } else {
    }
    %c0 = arith.constant 0 : index
    %c0_1 = arith.constant 0 : index
    %3 = vector.load %arg3[%c0, %c0_1] : memref<8x4xf32, #tpu.memory_space<vmem>>, vector<8x4xf32>
    %c0_2 = arith.constant 0 : index
    %c0_3 = arith.constant 0 : index
    %c0_4 = arith.constant 0 : index
    %4 = vector.load %arg2[%c0_2, %c0_3, %c0_4] : memref<1x4x16xf32, #tpu.memory_space<vmem>>, vector<1x4x16xf32>
    %5 = vector.shape_cast %4 : vector<1x4x16xf32> to vector<4x16xf32>
    %cst = arith.constant dense<0.000000e+00> : vector<8x16xf32>
    %6 = tpu.matmul %3, %5, %cst {dimension_numbers = #tpu.dot_dimension_numbers<[1], [0], [0], [1], [0, 0, 1, 1], [], []>} : vector<8x4xf32>, vector<4x16xf32>, vector<8x16xf32> -> vector<8x16xf32>
    %c0_5 = arith.constant 0 : index
    %c0_6 = arith.constant 0 : index
    %7 = vector.load %arg4[%c0_5, %c0_6] : memref<8x1xf32, #tpu.memory_space<vmem>>, vector<8x1xf32>
    %8 = vector.broadcast %7 : vector<8x1xf32> to vector<8x16xf32>
    %9 = arith.addf %6, %8 : vector<8x16xf32>
    %c0_7 = arith.constant 0 : index
    %c0_8 = arith.constant 0 : index
    %c0_9 = arith.constant 0 : index
    %10 = vector.load %arg5[%c0_7, %c0_8, %c0_9] : memref<1x8x16xf32, #tpu.memory_space<vmem>>, vector<1x8x16xf32>
    %11 = vector.shape_cast %10 : vector<1x8x16xf32> to vector<8x16xf32>
    %12 = vector.shape_cast %9 : vector<8x16xf32> to vector<1x8x16xf32>
    tpu.vector_store %arg5[%c0_7, %c0_8, %c0_9], %12 {strides = array<i32>} : memref<1x8x16xf32, #tpu.memory_space<vmem>>, vector<1x8x16xf32>,
    %c0_10 = arith.constant 0 : index
    %c0_11 = arith.constant 0 : index
    %c0_12 = arith.constant 0 : index
    %13 = vector.load %arg6[%c0_10, %c0_11, %c0_12] : memref<1x8x1xf32, #tpu.memory_space<vmem>>, vector<1x8x1xf32>
    %14 = vector.shape_cast %13 : vector<1x8x1xf32> to vector<8x1xf32>
    %cst_13 = arith.constant dense<0.000000e+00> : vector<8xf32>
    %15 = vector.multi_reduction <add>, %6, %cst_13 [1] : vector<8x16xf32> to vector<8xf32>
    %16 = vector.shape_cast %15 : vector<8xf32> to vector<8x1xf32>
    %17 = arith.addf %14, %16 : vector<8x1xf32>
    %c0_14 = arith.constant 0 : index
    %c0_15 = arith.constant 0 : index
    %c0_16 = arith.constant 0 : index
    %18 = vector.load %arg6[%c0_14, %c0_15, %c0_16] : memref<1x8x1xf32, #tpu.memory_space<vmem>>, vector<1x8x1xf32>
    %19 = vector.shape_cast %18 : vector<1x8x1xf32> to vector<8x1xf32>
    %20 = vector.shape_cast %17 : vector<8x1xf32> to vector<1x8x1xf32>
    tpu.vector_store %arg6[%c0_14, %c0_15, %c0_16], %20 {strides = array<i32>} : memref<1x8x1xf32, #tpu.memory_space<vmem>>, vector<1x8x1xf32>,
    %c0_17 = arith.constant 0 : index
    %c0_18 = arith.constant 0 : index
    %c0_19 = arith.constant 0 : index
    %21 = vector.load %arg7[%c0_17, %c0_18, %c0_19] : memref<1x8x1xf32, #tpu.memory_space<vmem>>, vector<1x8x1xf32>
    %22 = vector.shape_cast %21 : vector<1x8x1xf32> to vector<8x1xf32>
    %23 = arith.mulf %6, %6 : vector<8x16xf32>
    %cst_20 = arith.constant dense<0.000000e+00> : vector<8xf32>
    %24 = vector.multi_reduction <add>, %23, %cst_20 [1] : vector<8x16xf32> to vector<8xf32>
    %25 = vector.shape_cast %24 : vector<8xf32> to vector<8x1xf32>
    %26 = arith.addf %22, %25 : vector<8x1xf32>
    %c0_21 = arith.constant 0 : index
    %c0_22 = arith.constant 0 : index
    %c0_23 = arith.constant 0 : index
    %27 = vector.load %arg7[%c0_21, %c0_22, %c0_23] : memref<1x8x1xf32, #tpu.memory_space<vmem>>, vector<1x8x1xf32>
    %28 = vector.shape_cast %27 : vector<1x8x1xf32> to vector<8x1xf32>
    %29 = vector.shape_cast %26 : vector<8x1xf32> to vector<1x8x1xf32>
    tpu.vector_store %arg7[%c0_21, %c0_22, %c0_23], %29 {strides = array<i32>} : memref<1x8x1xf32, #tpu.memory_space<vmem>>, vector<1x8x1xf32>,
    return
  }
  func.func @transform_0(%arg0: i32, %arg1: i32) -> (i32, i32, i32) {
    %c0_i32 = arith.constant 0 : i32
    %c0_i32_0 = arith.constant 0 : i32
    return %arg0, %c0_i32, %arg1 : i32, i32, i32
  }
  func.func @transform_1(%arg0: i32, %arg1: i32) -> (i32, i32) {
    %c0_i32 = arith.constant 0 : i32
    %c0_i32_0 = arith.constant 0 : i32
    %c0_i32_1 = arith.constant 0 : i32
    return %c0_i32, %c0_i32_0 : i32, i32
  }
  func.func @transform_2(%arg0: i32, %arg1: i32) -> (i32, i32) {
    %c0_i32 = arith.constant 0 : i32
    %c0_i32_0 = arith.constant 0 : i32
    %c0_i32_1 = arith.constant 0 : i32
    return %c0_i32, %c0_i32_0 : i32, i32
  }
  func.func @transform_3(%arg0: i32, %arg1: i32) -> (i32, i32, i32) {
    %c0_i32 = arith.constant 0 : i32
    %c0_i32_0 = arith.constant 0 : i32
    return %arg0, %c0_i32, %arg1 : i32, i32, i32
  }
  func.func @transform_4(%arg0: i32, %arg1: i32) -> (i32, i32, i32) {
    %c0_i32 = arith.constant 0 : i32
    %c0_i32_0 = arith.constant 0 : i32
    %c0_i32_1 = arith.constant 0 : i32
    return %arg0, %c0_i32, %c0_i32_0 : i32, i32, i32
  }
  func.func @transform_5(%arg0: i32, %arg1: i32) -> (i32, i32, i32) {
    %c0_i32 = arith.constant 0 : i32
    %c0_i32_0 = arith.constant 0 : i32
    %c0_i32_1 = arith.constant 0 : i32
    return %arg0, %c0_i32, %c0_i32_0 : i32, i32, i32
  }
}

</mosaic_0001>

<llo_original>
// kernel: tpu_custom_call.1
$region0: #{tpu_custom_call.1}
  #allocation0 [shape = 'u32[]', space=smem, size = 0x4, offset = 0x4, fixed_abs, tag = 'smem constant byte address 0x4 - core index']
  #allocation1 [shape = 'u32[144,128]{1,0:T(1,128)}', space=vmem, size = 0x12000, scoped, tag = 'internal scratch']
  %s0 = inlined_call_operand.vmem [shape: f32[2,4,16], index: 0, kind: input, shape index: {}]
  %s1 = inlined_call_operand.vmem [shape: f32[8,4], index: 1, kind: input, shape index: {}]
  %s2 = inlined_call_operand.vmem [shape: f32[8,1], index: 2, kind: input, shape index: {}]
  %s3 = inlined_call_operand.hbm [shape: f32[2,8,16], index: 3, kind: output, shape index: {0}]
  %s4 = inlined_call_operand.vmem [shape: f32[2,8,1], index: 4, kind: output, shape index: {1}]
  %s5 = inlined_call_operand.vmem [shape: f32[2,8,1], index: 5, kind: output, shape index: {2}]
  %6 = xla_tuple %s3, %s4, %s5
  %s7 = sld [smem:[#allocation0]]
  $region65: #{tpu_custom_call.1} parent=0
    _
  %s9 = ssub.s32 1, %s7
  %s10 = scalar_select 0, %s9, %s7
  $region1: #{tpu_custom_call.1} parent=0
    #allocation2 [shape = 'u8[8192]{0}', space=vmem, size = 0x2000, scoped, tag = 'output window, operand 0']
    #allocation3 [shape = 's32[2]{0}', space=sflag, size = 0x8, scoped, tag = 'scoped memory for tpu_custom_call.1']
    %11 = vsyncpa [#allocation3], 0
    %s12 = scalar_lea.sflag [#allocation3], 1
    %13 = vsyncpa %s12, 0
    loop: start=0, step=1, limit=4
    $region2: #{tpu_custom_call.1} parent=1 // loop_pre_header
      _
    $region3: #{tpu_custom_call.1} parent=1 // loop_header
      %s15 = sphi 0, %s19
      %p16 = scmp.ge.s32.totalorder %s15, 4
      %s22 = sphi 0, %s34
      %s23 = sphi 0, %s30
      %s24 = sphi 0, %s22
      %s25 = sphi 0, %s23
      %s26 = sphi 0, %s24
      %s27 = sphi 0, %s25
      %s39 = sphi 0, %s41
      %s42 = sphi 0, %s39
      %s43 = sphi 0, %s42
      %s59 = sphi 0, %s43
      %s63 = sphi 0, %s63
      %s65 = sphi 0, %s63
      %s66 = sphi 0, %s65
      %s80 = sphi 0, %s66
      %s84 = sphi 0, %s84
      %s86 = sphi 0, %s84
      %s87 = sphi 0, %s86
      %s101 = sphi 0, %s87
      %s109 = sphi 0, %s111
      %s112 = sphi 0, %s109
      %s113 = sphi 0, %s112
      %s129 = sphi 0, %s113
      %s135 = sphi 0, %s137
      %s138 = sphi 0, %s135
      %s139 = sphi 0, %s138
      %s155 = sphi 0, %s139
      %s161 = sphi 0, %s163
      %s164 = sphi 0, %s161
      %s165 = sphi 0, %s164
      %s181 = sphi 0, %s165
    $region4: #{tpu_custom_call.1} parent=1 // loop_header_branch
      %18 = sbr.rel (%p16) target = $region8
    $region5: #{tpu_custom_call.1} parent=1 // loop_body
      %s20 = ssub.s32 %s15, 1
      %s21 = ssub.s32 %s15, 2
      %s28 = sadd.s32 1, %s23
      %p29 = scmp.ge.s32.totalorder %s28, 1
      %s30 = scalar_select %p29, 0, %s28
      %s31 = sadd.s32 1, %s22
      %s32 = scalar_select %p29, %s31, %s22
      %p33 = scmp.ge.s32.totalorder %s32, 2
      %s34 = scalar_select %p33, 0, %s32
      %s35 = ssub.s32 %s22, %s34
      %s36 = ssub.s32 %s23, %s30
      %s37 = sor.u32 %s35, %s36
      %p38 = scmp.eq.s32.totalorder %s37, 0
      %s40 = sadd.s32 %s39, 1
      %s41 = scalar_select %p38, %s39, %s40
      %p44 = pneg %p38
      %p45 = scmp.eq.s32.totalorder %s15, 1
      %p46 = por %p44, %p45
      %p47 = scmp.ne.s32.totalorder %s39, %s42
      %p48 = scmp.eq.s32.totalorder %s15, 0
      %p49 = por %p47, %p48
      %p50 = scmp.ne.s32.totalorder %s39, %s42
      %p51 = scmp.eq.s32.totalorder %s20, 1
      %p52 = por %p50, %p51
      %p53 = scmp.ne.s32.totalorder %s42, %s43
      %p54 = scmp.eq.s32.totalorder %s20, 0
      %p55 = por %p53, %p54
      %p56 = scmp.ne.s32.totalorder %s42, %s43
      %p57 = scmp.eq.s32.totalorder %s21, 1
      %p58 = por %p56, %p57
      %p60 = scmp.ne.s32.totalorder %s43, %s59
      %p61 = scmp.eq.s32.totalorder %s21, 0
      %p62 = por %p60, %p61
      %s64 = sadd.s32 %s63, 1
      %p67 = scmp.eq.s32.totalorder %s15, 1
      %p68 = scmp.ne.s32.totalorder %s63, %s65
      %p69 = scmp.eq.s32.totalorder %s15, 0
      %p70 = por %p68, %p69
      %p71 = scmp.ne.s32.totalorder %s63, %s65
      %p72 = scmp.eq.s32.totalorder %s20, 1
      %p73 = por %p71, %p72
      %p74 = scmp.ne.s32.totalorder %s65, %s66
      %p75 = scmp.eq.s32.totalorder %s20, 0
      %p76 = por %p74, %p75
      %p77 = scmp.ne.s32.totalorder %s65, %s66
      %p78 = scmp.eq.s32.totalorder %s21, 1
      %p79 = por %p77, %p78
      %p81 = scmp.ne.s32.totalorder %s66, %s80
      %p82 = scmp.eq.s32.totalorder %s21, 0
      %p83 = por %p81, %p82
      %s85 = sadd.s32 %s84, 1
      %p88 = scmp.eq.s32.totalorder %s15, 1
      %p89 = scmp.ne.s32.totalorder %s84, %s86
      %p90 = scmp.eq.s32.totalorder %s15, 0
      %p91 = por %p89, %p90
      %p92 = scmp.ne.s32.totalorder %s84, %s86
      %p93 = scmp.eq.s32.totalorder %s20, 1
      %p94 = por %p92, %p93
      %p95 = scmp.ne.s32.totalorder %s86, %s87
      %p96 = scmp.eq.s32.totalorder %s20, 0
      %p97 = por %p95, %p96
      %p98 = scmp.ne.s32.totalorder %s86, %s87
      %p99 = scmp.eq.s32.totalorder %s21, 1
      %p100 = por %p98, %p99
      %p102 = scmp.ne.s32.totalorder %s87, %s101
      %p103 = scmp.eq.s32.totalorder %s21, 0
      %p104 = por %p102, %p103
      %s105 = ssub.s32 %s22, %s34
      %s106 = ssub.s32 %s23, %s30
      %s107 = sor.u32 %s105, %s106
      %p108 = scmp.eq.s32.totalorder %s107, 0
      %s110 = sadd.s32 %s109, 1
      %s111 = scalar_select %p108, %s109, %s110
      %p114 = pneg %p108
      %p115 = scmp.eq.s32.totalorder %s15, 1
      %p116 = por %p114, %p115
      %p117 = scmp.ne.s32.totalorder %s109, %s112
      %p118 = scmp.eq.s32.totalorder %s15, 0
      %p119 = por %p117, %p118
      %p120 = scmp.ne.s32.totalorder %s109, %s112
      %p121 = scmp.eq.s32.totalorder %s20, 1
      %p122 = por %p120, %p121
      %p123 = scmp.ne.s32.totalorder %s112, %s113
      %p124 = scmp.eq.s32.totalorder %s20, 0
      %p125 = por %p123, %p124
      %p126 = scmp.ne.s32.totalorder %s112, %s113
      %p127 = scmp.eq.s32.totalorder %s21, 1
      %p128 = por %p126, %p127
      %p130 = scmp.ne.s32.totalorder %s113, %s129
      %p131 = scmp.eq.s32.totalorder %s21, 0
      %p132 = por %p130, %p131
      %s133 = ssub.s32 %s22, %s34
      %p134 = scmp.eq.s32.totalorder %s133, 0
      %s136 = sadd.s32 %s135, 1
      %s137 = scalar_select %p134, %s135, %s136
      %p140 = pneg %p134
      %p141 = scmp.eq.s32.totalorder %s15, 1
      %p142 = por %p140, %p141
      %p143 = scmp.ne.s32.totalorder %s135, %s138
      %p144 = scmp.eq.s32.totalorder %s15, 0
      %p145 = por %p143, %p144
      %p146 = scmp.ne.s32.totalorder %s135, %s138
      %p147 = scmp.eq.s32.totalorder %s20, 1
      %p148 = por %p146, %p147
      %p149 = scmp.ne.s32.totalorder %s138, %s139
      %p150 = scmp.eq.s32.totalorder %s20, 0
      %p151 = por %p149, %p150
      %p152 = scmp.ne.s32.totalorder %s138, %s139
      %p153 = scmp.eq.s32.totalorder %s21, 1
      %p154 = por %p152, %p153
      %p156 = scmp.ne.s32.totalorder %s139, %s155
      %p157 = scmp.eq.s32.totalorder %s21, 0
      %p158 = por %p156, %p157
      %s159 = ssub.s32 %s22, %s34
      %p160 = scmp.eq.s32.totalorder %s159, 0
      %s162 = sadd.s32 %s161, 1
      %s163 = scalar_select %p160, %s161, %s162
      %p166 = pneg %p160
      %p167 = scmp.eq.s32.totalorder %s15, 1
      %p168 = por %p166, %p167
      %p169 = scmp.ne.s32.totalorder %s161, %s164
      %p170 = scmp.eq.s32.totalorder %s15, 0
      %p171 = por %p169, %p170
      %p172 = scmp.ne.s32.totalorder %s161, %s164
      %p173 = scmp.eq.s32.totalorder %s20, 1
      %p174 = por %p172, %p173
      %p175 = scmp.ne.s32.totalorder %s164, %s165
      %p176 = scmp.eq.s32.totalorder %s20, 0
      %p177 = por %p175, %p176
      %p178 = scmp.ne.s32.totalorder %s164, %s165
      %p179 = scmp.eq.s32.totalorder %s21, 1
      %p180 = por %p178, %p179
      %p182 = scmp.ne.s32.totalorder %s165, %s181
      %p183 = scmp.eq.s32.totalorder %s21, 0
      %p184 = por %p182, %p183
      %p185 = scmp.le.s32.totalorder 1, %s15
      %p186 = scmp.lt.s32.totalorder %s15, 3
      %p187 = pnand %p185, %p186
      %p188 = pneg %p187
      // Predicated region
      $region9: #{tpu_custom_call.1} parent=5 // pred_check
        _
      $region10: #{tpu_custom_call.1} parent=5 // pred_check_branch
        %190 = sbr.rel (%p187) target = $region12
      $region11: #{tpu_custom_call.1} parent=5 // pred_region
        %s191 = ssub.s32 %s15, 1
        // Predicated region
        $region13: #{tpu_custom_call.1} parent=11 // pred_check
          %p192 = pneg %p76
        $region14: #{tpu_custom_call.1} parent=11 // pred_check_branch
          %194 = sbr.rel (%p192) target = $region16
        $region15: #{tpu_custom_call.1} parent=11 // pred_region
          _
        $region16: #{tpu_custom_call.1} parent=11 // pred_fallthru
          _
        // Predicated region
        $region17: #{tpu_custom_call.1} parent=11 // pred_check
          %p195 = pneg %p97
        $region18: #{tpu_custom_call.1} parent=11 // pred_check_branch
          %197 = sbr.rel (%p195) target = $region20
        $region19: #{tpu_custom_call.1} parent=11 // pred_region
          _
        $region20: #{tpu_custom_call.1} parent=11 // pred_fallthru
          _
      $region12: #{tpu_custom_call.1} parent=5 // pred_fallthru
        _
      %p198 = scmp.lt.s32.totalorder %s15, 2
      // Predicated region
      $region21: #{tpu_custom_call.1} parent=5 // pred_check
        %p199 = pneg %p198
      $region22: #{tpu_custom_call.1} parent=5 // pred_check_branch
        %201 = sbr.rel (%p199) target = $region24
      $region23: #{tpu_custom_call.1} parent=5 // pred_region
        // Predicated region
        $region25: #{tpu_custom_call.1} parent=23 // pred_check
          %p202 = pneg %p49
        $region26: #{tpu_custom_call.1} parent=23 // pred_check_branch
          %204 = sbr.rel (%p202) target = $region28
        $region27: #{tpu_custom_call.1} parent=23 // pred_region
          %p205 = scmp.lt.s32.totalorder %s22, 1
          %s206 = scalar_select %p205, %s22, 1
          %p207 = scmp.lt.s32.totalorder %s23, 0
          %s208 = scalar_select %p207, %s23, 0
          %s209 = sadd.s32 %s208, %s206
          %s210 = smul.addr %s209, 4
          %s211 = scalar_lea.vmem %s0, %s210
        $region28: #{tpu_custom_call.1} parent=23 // pred_fallthru
          _
      $region24: #{tpu_custom_call.1} parent=5 // pred_fallthru
        _
      %p212 = scmp.le.s32.totalorder 1, %s15
      %p213 = scmp.lt.s32.totalorder %s15, 3
      %p214 = pnand %p212, %p213
      %p215 = pneg %p214
      // Predicated region
      $region29: #{tpu_custom_call.1} parent=5 // pred_check
        _
      $region30: #{tpu_custom_call.1} parent=5 // pred_check_branch
        %217 = sbr.rel (%p214) target = $region32
      $region31: #{tpu_custom_call.1} parent=5 // pred_region
        %s218 = ssub.s32 %s15, 1
        %p219 = scmp.lt.s32.totalorder %s24, 1
        %s220 = scalar_select %p219, %s24, 1
        %p221 = scmp.lt.s32.totalorder %s25, 0
        %s222 = scalar_select %p221, %s25, 0
        %s223 = sadd.s32 %s222, %s220
        %s224 = smul.addr %s223, 4
        %s225 = scalar_lea.vmem %s0, %s224
        %p226 = pneg %p55
        %p227 = pneg %p52
        %p228 = pneg %p76
        %p229 = pneg %p73
        %p230 = pneg %p97
        %p231 = pneg %p94
        %p232 = pneg %p125
        %p233 = pneg %p122
        %s234 = sand.u32 %s112, 1
        %s235 = scalar_lea.sflag [#allocation3], %s234
        %s236 = sand.u32 %s112, 1
        %s237 = smul.addr %s236, 8
        %s238 = scalar_lea.vmem [#allocation2], %s237
        %p239 = pneg %p151
        %p240 = pneg %p148
        %p241 = scmp.lt.s32.totalorder %s24, 1
        %s242 = scalar_select %p241, %s24, 1
        %s243 = smul.addr %s242, 8
        %s244 = scalar_lea.vmem %s4, %s243
        %p245 = pneg %p177
        %p246 = pneg %p174
        %p247 = scmp.lt.s32.totalorder %s24, 1
        %s248 = scalar_select %p247, %s24, 1
        %s249 = smul.addr %s248, 8
        %s250 = scalar_lea.vmem %s5, %s249
        %p251 = scmp.lt.s32.totalorder %s24, 1
        %s252 = scalar_select %p251, %s24, 1
        %p253 = scmp.lt.s32.totalorder %s25, 0
        %s254 = scalar_select %p253, %s25, 0
        %s255 = sadd.s32 %s254, %s252
        %s256 = smul.addr %s255, 4
        %s257 = scalar_lea.vmem %s0, %s256
        %p258 = scmp.lt.s32.totalorder %s24, 1
        %s259 = scalar_select %p258, %s24, 1
        %s260 = smul.addr %s259, 8
        %s261 = scalar_lea.vmem %s4, %s260
        %p262 = scmp.lt.s32.totalorder %s24, 1
        %s263 = scalar_select %p262, %s24, 1
        %s264 = smul.addr %s263, 8
        %s265 = scalar_lea.vmem %s5, %s264
        %p266 = scmp.eq.s32.totalorder %s25, 0
        // Predicated region
        $region33: #{tpu_custom_call.1} parent=31 // pred_check
          %p267 = pneg %p266
        $region34: #{tpu_custom_call.1} parent=31 // pred_check_branch
          %269 = sbr.rel (%p267) target = $region36
        $region35: #{tpu_custom_call.1} parent=31 // pred_region
          %vm270 = vcmask 7168
          %271 = vst.msk [vmem:[%s261] sm:$0xff] %vm270, 0.0
          %272 = vst.msk [vmem:[%s265] sm:$0xff] %vm270, 0.0
        $region36: #{tpu_custom_call.1} parent=31 // pred_fallthru
          _
        %v273 = vld [vmem:[%s1] sm:$0xff]
        %v274 = vld [vmem:[%s257] sm:$0xf]
        %vm275 = vcmask 31744
        %v277 = vsel %vm275, %v273, 0
        %vm279 = vcmask 1043456
        %v281 = vsel %vm279, %v274, 0
        %283 = vmatprep.subr.mxu0 0.0
        %284 = vmatpush1.msra.mxu0 %v281
        %285 = vmatprep.subr.mxu0 0.0
        %286 = vmatpush1.msra.mxu0 0.0
        %287 = vmatprep.subr.mxu0 0.0
        %288 = vmatpush1.msra.mxu0 0.0
        %289 = vmatprep.subr.mxu0 0.0
        %290 = vmatpush1.msra.mxu0 0.0
        %291 = vmatprep.subr.mxu0 0.0
        %292 = vmatpush1.msra.mxu0 0.0
        %293 = vmatprep.subr.mxu0 0.0
        %294 = vmatpush1.msra.mxu0 0.0
        %295 = vmatprep.subr.mxu0 0.0
        %296 = vmatpush1.msra.mxu0 0.0
        %297 = vmatprep.subr.mxu0 0.0
        %298 = vmatpush1.msra.mxu0 0.0
        %299 = vmatprep.subr.mxu0 0.0
        %300 = vmatpush1.msra.mxu0 0.0
        %301 = vmatprep.subr.mxu0 0.0
        %302 = vmatpush1.msra.mxu0 0.0
        %303 = vmatprep.subr.mxu0 0.0
        %304 = vmatpush1.msra.mxu0 0.0
        %305 = vmatprep.subr.mxu0 0.0
        %306 = vmatpush1.msra.mxu0 0.0
        %307 = vmatprep.subr.mxu0 0.0
        %308 = vmatpush1.msra.mxu0 0.0
        %309 = vmatprep.subr.mxu0 0.0
        %310 = vmatpush1.msra.mxu0 0.0
        %311 = vmatprep.subr.mxu0 0.0
        %312 = vmatpush1.msra.mxu0 0.0
        %313 = vmatprep.subr.mxu0 0.0
        %314 = vmatpush1.msra.mxu0 0.0
        %315 = vmatprep.subr.mxu0 0.0
        %316 = vmatpush1.msra.mxu0 0.0
        %317 = vmatprep.subr.mxu0 0.0
        %318 = vmatpush1.msra.mxu0 0.0
        %319 = vmatprep.subr.mxu0 0.0
        %320 = vmatpush1.msra.mxu0 0.0
        %321 = vmatprep.subr.mxu0 0.0
        %322 = vmatpush1.msra.mxu0 0.0
        %323 = vmatprep.subr.mxu0 0.0
        %324 = vmatpush1.msra.mxu0 0.0
        %325 = vmatprep.subr.mxu0 0.0
        %326 = vmatpush1.msra.mxu0 0.0
        %327 = vmatprep.subr.mxu0 0.0
        %328 = vmatpush1.msra.mxu0 0.0
        %329 = vmatprep.subr.mxu0 0.0
        %330 = vmatpush1.msra.mxu0 0.0
        %331 = vmatprep.subr.mxu0 0.0
        %332 = vmatpush1.msra.mxu0 0.0
        %333 = vmatprep.subr.mxu0 0.0
        %334 = vmatpush1.msra.mxu0 0.0
        %335 = vmatprep.subr.mxu0 0.0
        %336 = vmatpush1.msra.mxu0 0.0
        %337 = vmatprep.subr.mxu0 0.0
        %338 = vmatpush1.msra.mxu0 0.0
        %339 = vmatprep.subr.mxu0 0.0
        %340 = vmatpush1.msra.mxu0 0.0
        %341 = vmatprep.subr.mxu0 0.0
        %342 = vmatpush1.msra.mxu0 0.0
        %343 = vmatprep.subr.mxu0 0.0
        %344 = vmatpush1.msra.mxu0 0.0
        %345 = vmatprep.subr.mxu0 0.0
        %346 = vmatpush1.msra.mxu0 0.0
        %347 = vmatprep.mubr.f32.mxu0 0.0
        %348 = vmatmul.mubr.f32.gmra.mrb[0].mxu0 %v277
        %v349 = vpop.f32.mrb[0].mxu0
        %v350 = vadd.f32 0.0, %v349
        %v351 = vpop.f32.mrb[0].mxu0
        %352 = vdwg.mxu0
        %v353 = vld [vmem:[%s2] sm:$0xff]
        %355 = vset.pattern.permute.xlu0 0
        %356 = vperm.xlu0 %355, %v353
        %v357 = vpop.permute.xlu0 %356
        %v359 = vadd.f32 %v350, %v357
        %vm360 = vcmask 130048
        %361 = vst.msk [vmem:[%s238] sm:$0xff] %vm360, %v359
        %v362 = vld [vmem:[%s261] sm:$0xff]
        %v363 = vsel %vm360, %v350, 0.0
        %364 = vadd.xlane.f32.xlu0 %v363
        %v365 = vpop.xlane.xlu0 %364
        %v366 = vadd.f32 %v362, %v365
        %vm367 = vcmask 7168
        %368 = vst.msk [vmem:[%s261] sm:$0xff] %vm367, %v366
        %v369 = vld [vmem:[%s265] sm:$0xff]
        %v370 = vmul.f32 %v350, %v350
        %v371 = vsel %vm360, %v370, 0.0
        %372 = vadd.xlane.f32.xlu0 %v371
        %v373 = vpop.xlane.xlu0 %372
        %v374 = vadd.f32 %v369, %v373
        %375 = vst.msk [vmem:[%s265] sm:$0xff] %vm367, %v374
        %s376 = sand.u32 %s112, 1
        %s377 = scalar_lea.sflag [#allocation3], %s376
        %s378 = sand.u32 %s112, 1
        %s379 = smul.addr %s378, 8
        %s380 = scalar_lea.vmem [#allocation2], %s379
        %p381 = scmp.lt.s32.totalorder %s24, 1
        %s382 = scalar_select %p381, %s24, 1
        %s383 = smul.addr %s382, 8
        %s384 = scalar_lea.vmem %s4, %s383
        %p385 = scmp.lt.s32.totalorder %s24, 1
        %s386 = scalar_select %p385, %s24, 1
        %s387 = smul.addr %s386, 8
        %s388 = scalar_lea.vmem %s5, %s387
        // Predicated region
        $region37: #{tpu_custom_call.1} parent=31 // pred_check
          %p389 = pneg %p122
        $region38: #{tpu_custom_call.1} parent=31 // pred_check_branch
          %391 = sbr.rel (%p389) target = $region40
        $region39: #{tpu_custom_call.1} parent=31 // pred_region
          %s393 = ssub.s32 128, 128
          %394 = vsyncadd %s377, %s393
          %s395 = sadd.s32 %s25, %s24
          %s396 = smul.addr %s395, 128
          %s397 = scalar_lea.hbm %s3, %s396
          %s399 = sshll.u32 %s380, 4
          %s400 = int_to_ptr.vmem [resolvable:$true] %s399
          %402 = dma.vmem_to_hbm [thread:$0]  %s400, 128, %s397, %s377
        $region40: #{tpu_custom_call.1} parent=31 // pred_fallthru
          _
        // Predicated region
        $region41: #{tpu_custom_call.1} parent=31 // pred_check
          %p403 = pneg %p148
        $region42: #{tpu_custom_call.1} parent=31 // pred_check_branch
          %405 = sbr.rel (%p403) target = $region44
        $region43: #{tpu_custom_call.1} parent=31 // pred_region
          _
        $region44: #{tpu_custom_call.1} parent=31 // pred_fallthru
          _
        // Predicated region
        $region45: #{tpu_custom_call.1} parent=31 // pred_check
          %p406 = pneg %p174
        $region46: #{tpu_custom_call.1} parent=31 // pred_check_branch
          %408 = sbr.rel (%p406) target = $region48
        $region47: #{tpu_custom_call.1} parent=31 // pred_region
          _
        $region48: #{tpu_custom_call.1} parent=31 // pred_fallthru
          _
      $region32: #{tpu_custom_call.1} parent=5 // pred_fallthru
        _
      %p409 = scmp.le.s32.totalorder 2, %s15
      // Predicated region
      $region49: #{tpu_custom_call.1} parent=5 // pred_check
        %p410 = pneg %p409
      $region50: #{tpu_custom_call.1} parent=5 // pred_check_branch
        %412 = sbr.rel (%p410) target = $region52
      $region51: #{tpu_custom_call.1} parent=5 // pred_region
        %s413 = ssub.s32 %s15, 2
        // Predicated region
        $region53: #{tpu_custom_call.1} parent=51 // pred_check
          %p414 = pneg %p128
        $region54: #{tpu_custom_call.1} parent=51 // pred_check_branch
          %416 = sbr.rel (%p414) target = $region56
        $region55: #{tpu_custom_call.1} parent=51 // pred_region
          %s417 = sand.u32 %s113, 1
          %s418 = scalar_lea.sflag [#allocation3], %s417
          %s419 = sand.u32 %s113, 1
          %s420 = smul.addr %s419, 8
          %s421 = scalar_lea.vmem [#allocation2], %s420
          %422 = dma.done %s418, 128
        $region56: #{tpu_custom_call.1} parent=51 // pred_fallthru
          _
        // Predicated region
        $region57: #{tpu_custom_call.1} parent=51 // pred_check
          %p423 = pneg %p154
        $region58: #{tpu_custom_call.1} parent=51 // pred_check_branch
          %425 = sbr.rel (%p423) target = $region60
        $region59: #{tpu_custom_call.1} parent=51 // pred_region
          %p426 = scmp.lt.s32.totalorder %s26, 1
          %s427 = scalar_select %p426, %s26, 1
          %s428 = smul.addr %s427, 8
          %s429 = scalar_lea.vmem %s4, %s428
        $region60: #{tpu_custom_call.1} parent=51 // pred_fallthru
          _
        // Predicated region
        $region61: #{tpu_custom_call.1} parent=51 // pred_check
          %p430 = pneg %p180
        $region62: #{tpu_custom_call.1} parent=51 // pred_check_branch
          %432 = sbr.rel (%p430) target = $region64
        $region63: #{tpu_custom_call.1} parent=51 // pred_region
          %p433 = scmp.lt.s32.totalorder %s26, 1
          %s434 = scalar_select %p433, %s26, 1
          %s435 = smul.addr %s434, 8
          %s436 = scalar_lea.vmem %s5, %s435
        $region64: #{tpu_custom_call.1} parent=51 // pred_fallthru
          _
      $region52: #{tpu_custom_call.1} parent=5 // pred_fallthru
        _
    $region6: #{tpu_custom_call.1} parent=1 // loop_footer
      %s19 = sadd.s32 1, %s15
    $region7: #{tpu_custom_call.1} parent=1 // loop_footer_branch
      %14 = sbr.rel target = $region3
    $region8: #{tpu_custom_call.1} parent=1 // loop_exit
      _
    %437 = vsyncpa [#allocation3], 1
    %s438 = scalar_lea.sflag [#allocation3], 1
    %439 = vsyncpa %s438, 1

</llo_original>
